<compile_context>
chip_gen: v5e
topology: v5e:2x2
jax: 0.10.0
libtpu: 0.0.40
codegen_flags: <defaults>
</compile_context>

<pallas_src>
import jax
import jax.numpy as jnp
from jax.experimental import pallas as pl
from jax.experimental.pallas import tpu as pltpu

EPS = 1e-5


def _fused_conv_block_kernel(x_ref, w1_ref, w2_ref,
                             g1_ref, b1_ref, g2_ref, b2_ref,
                             gsum_ref, gbc_ref,
                             o_ref, xpad_ref, ypad_ref):
    """Fused (conv3x3 -> BN(train) -> ReLU) x 2 on a (w, channel)-interleaved layout.

    x_ref:    (N, H, W*Cin)        input rows; lane axis = (w, cin) interleaved
    w1_ref:   (3, W*Cin,  W*Cout)  banded stage-1 weights (one block per dy)
    w2_ref:   (3, W*Cout, W*Cout)  banded stage-2 weights
    g*_ref:   (1, Cout)            BN gamma
    b*_ref:   (1, Cout)            BN beta
    gsum_ref: (W*Cout, Cout)       0/1: per-channel gather from lane layout
    gbc_ref:  (Cout, W*Cout)       0/1: per-channel broadcast to lane layout
    o_ref:    (N*H, W*Cout)        lane-dense output slab
    xpad_ref: (N, H+2, W*Cin)      VMEM scratch with zero row halo (stage 1)
    ypad_ref: (N, H+2, W*Cout)     VMEM scratch with zero row halo (stage 2)
    """
    N, H, _ = x_ref.shape
    WCout = o_ref.shape[-1]
    Cout = gsum_ref.shape[-1]
    Wd = WCout // Cout
    NH = N * H
    inv_n = 1.0 / float(N * H * Wd)     # BN count over (N, H, W)

    def stage(pad_ref, wb_ref, gam_ref, bet_ref):
        K = pad_ref.shape[-1]
        # 3x3 conv as 3 matmuls (one per vertical tap dy); horizontal taps and
        # the W-boundary zero padding are folded into the banded weights.
        acc = jnp.zeros((NH, WCout), jnp.float32)
        for dy in range(3):
            slab = pad_ref[:, dy:dy + H, :].reshape(NH, K)
            acc = acc + jnp.dot(slab, wb_ref[dy],
                                preferred_element_type=jnp.float32)
        # NOTE: conv bias omitted - training-mode BN subtracts the batch mean,
        # which cancels a per-channel constant exactly.
        # One-pass batch statistics (biased variance, eps=1e-5).
        col_s = jnp.sum(acc, axis=0, keepdims=True)           # (1, W*Cout)
        col_ss = jnp.sum(acc * acc, axis=0, keepdims=True)    # (1, W*Cout)
        s = jnp.dot(col_s, gsum_ref[...], preferred_element_type=jnp.float32)
        ss = jnp.dot(col_ss, gsum_ref[...], preferred_element_type=jnp.float32)
        mean = s * inv_n                                       # (1, Cout)
        var = ss * inv_n - mean * mean
        scale_c = gam_ref[...] * jax.lax.rsqrt(var + EPS)      # (1, Cout)
        shift_c = bet_ref[...] - mean * scale_c                # (1, Cout)
        scale_l = jnp.dot(scale_c, gbc_ref[...], preferred_element_type=jnp.float32)
        shift_l = jnp.dot(shift_c, gbc_ref[...], preferred_element_type=jnp.float32)
        return jnp.maximum(acc * scale_l + shift_l, 0.0)       # (N*H, W*Cout)

    # ---- stage 1: build the zero row halo in VMEM (no host-side jnp.pad) ----
    xpad_ref[...] = jnp.zeros_like(xpad_ref)
    xpad_ref[:, 1:H + 1, :] = x_ref[...]
    y1 = stage(xpad_ref, w1_ref, g1_ref, b1_ref)

    # ---- stage 2: the intermediate stays in VMEM (no HBM round-trip) --------
    ypad_ref[...] = jnp.zeros_like(ypad_ref)
    ypad_ref[:, 1:H + 1, :] = y1.reshape(N, H, WCout)
    y2 = stage(ypad_ref, w2_ref, g2_ref, b2_ref)

    # Lane-dense (last dim multiple of 128) unmasked store.
    o_ref[...] = y2.astype(o_ref.dtype)


def _banded_weights(wk, W):
    """Expand a (3, 3, Cin, Cout) conv kernel to (3, W*Cin, W*Cout) banded mats.

    band[dy][(w+dx-1)*Cin + ci, w*Cout + co] = wk[dy, dx, ci, co]; out-of-range
    horizontal taps are simply absent, which is equivalent to zero padding in W.
    Host-side, tiny.
    """
    _, _, cin, cout = wk.shape
    bands = []
    for dy in range(3):
        b = jnp.zeros((W, cin, W, cout), wk.dtype)
        for dx in range(3):
            shift = jnp.eye(W, W, k=1 - dx, dtype=wk.dtype)       # u == w + dx - 1
            b = b + jnp.einsum('uw,ic->uiwc', shift, wk[dy, dx])
        bands.append(b.reshape(W * cin, W * cout))
    return jnp.stack(bands, axis=0)


@jax.jit
def conv_block_3_forward(x_nchw, params):
    """PyTorch-equivalent forward: NCHW in, NCHW out."""
    N, Cin, H, W = x_nchw.shape
    Cout = params["g1"].shape[0]

    # NCHW -> (N, H, W*Cin): interface plumbing (PyTorch hands us NCHW). Done
    # once on the host; with Cin=4 this transpose is lane-sparse by nature.
    x2d = jnp.transpose(x_nchw, (0, 2, 3, 1)).reshape(N, H, W * Cin)

    # Banded conv weights (host-side, per dy) and 0/1 channel gather/broadcast
    # matrices for BN stats in the (w, channel)-interleaved lane layout.
    w1b = _banded_weights(params["w1"], W)                    # (3, W*Cin,  W*Cout)
    w2b = _banded_weights(params["w2"], W)                    # (3, W*Cout, W*Cout)
    gsum = jnp.tile(jnp.eye(Cout, dtype=jnp.float32), (W, 1))  # (W*Cout, Cout)
    gbc = gsum.T                                               # (Cout, W*Cout)

    flops = (3 * 2 * (N * H) * (W * Cin) * (W * Cout)
             + 3 * 2 * (N * H) * (W * Cout) * (W * Cout))
    bytes_accessed = 4 * (N * H * W * Cin
                          + 3 * W * Cin * W * Cout
                          + 3 * W * Cout * W * Cout
                          + 2 * W * Cout * Cout
                          + 4 * Cout
                          + N * H * W * Cout)

    out_flat = pl.pallas_call(
        _fused_conv_block_kernel,
        out_shape=jax.ShapeDtypeStruct((N * H, W * Cout), jnp.float32),
        in_specs=[pl.BlockSpec(memory_space=pltpu.MemorySpace.VMEM)] * 9,
        out_specs=pl.BlockSpec(memory_space=pltpu.MemorySpace.VMEM),
        scratch_shapes=[
            pltpu.VMEM((N, H + 2, W * Cin), jnp.float32),
            pltpu.VMEM((N, H + 2, W * Cout), jnp.float32),
        ],
        cost_estimate=pl.CostEstimate(flops=flops, transcendentals=2 * Cout,
                                      bytes_accessed=bytes_accessed),
    )(x2d, w1b, w2b,
      params["g1"].reshape(1, -1), params["be1"].reshape(1, -1),
      params["g2"].reshape(1, -1), params["be2"].reshape(1, -1),
      gsum, gbc)

    # (N*H, W*Cout) -> NCHW (interface plumbing).
    out = out_flat.reshape(N, H, W, Cout)
    return jnp.transpose(out, (0, 3, 1, 2))


def init_conv_block_3_params(key, ch_in, ch_out):
    """Deterministic params mirroring nn.Conv2d / nn.BatchNorm2d defaults."""
    k1, k2, k3, k4 = jax.random.split(key, 4)

    def conv_init(kw, kb, cin, cout):
        fan_in = cin * 3 * 3
        bound = 1.0 / jnp.sqrt(fan_in)
        # PyTorch weight (Cout, Cin, 3, 3) -> kernel layout (3, 3, Cin, Cout)
        w_torch = jax.random.uniform(kw, (cout, cin, 3, 3),
                                     minval=-bound, maxval=bound,
                                     dtype=jnp.float32)
        w = jnp.transpose(w_torch, (2, 3, 1, 0))
        b = jax.random.uniform(kb, (cout,), minval=-bound, maxval=bound,
                               dtype=jnp.float32)
        return w, b

    w1, b1 = conv_init(k1, k2, ch_in, ch_out)
    w2, b2 = conv_init(k3, k4, ch_out, ch_out)
    # Conv biases kept for PyTorch parity; they are mathematically cancelled by
    # the training-mode BN mean subtraction and are not fed to the kernel.
    g1 = jnp.ones((ch_out,), jnp.float32)
    be1 = jnp.zeros((ch_out,), jnp.float32)
    g2 = jnp.ones((ch_out,), jnp.float32)
    be2 = jnp.zeros((ch_out,), jnp.float32)
    return dict(w1=w1, b1=b1, g1=g1, be1=be1,
                w2=w2, b2=b2, g2=g2, be2=be2)


def _reference_forward(x_nchw, params):
    """Pure-JAX reference (conv3x3 + bias -> train-mode BN -> ReLU) x 2."""
    def stage(x, w, b, g, be):
        y = jax.lax.conv_general_dilated(
            x, w, window_strides=(1, 1), padding=((1, 1), (1, 1)),
            dimension_numbers=("NHWC", "HWIO", "NHWC"),
            precision=jax.lax.Precision.HIGHEST) + b
        mean = jnp.mean(y, axis=(0, 1, 2), keepdims=True)
        var = jnp.mean((y - mean) ** 2, axis=(0, 1, 2), keepdims=True)
        y = (y - mean) * jax.lax.rsqrt(var + EPS) * g + be
        return jnp.maximum(y, 0.0)

    x = jnp.transpose(x_nchw, (0, 2, 3, 1))
    x = stage(x, params["w1"], params["b1"], params["g1"], params["be1"])
    x = stage(x, params["w2"], params["b2"], params["g2"], params["be2"])
    return jnp.transpose(x, (0, 3, 1, 2))


if __name__ == "__main__":
    key = jax.random.PRNGKey(0)
    kx, kp = jax.random.split(key)

    N, CH_IN, CH_OUT, H, W = 2, 4, 8, 16, 16
    x = jax.random.normal(kx, (N, CH_IN, H, W), dtype=jnp.float32)
    params = init_conv_block_3_params(kp, CH_IN, CH_OUT)

    out = conv_block_3_forward(x, params)
    jax.block_until_ready(out)

    assert out.shape == (N, CH_OUT, H, W), out.shape
    assert bool(jnp.all(jnp.isfinite(out)))
    assert bool(jnp.all(out >= 0.0))  # ReLU output

    ref = _reference_forward(x, params)
    assert bool(jnp.allclose(out, ref, rtol=1e-2, atol=1e-2)), \
        float(jnp.max(jnp.abs(out - ref)))

    print("KERNEL_OK")
</pallas_src>

<mosaic_0001>
module attributes {stable_mosaic.version = 11 : i64} {
  func.func @_fused_conv_block_kernel(%arg0: memref<2x16x64xf32, #tpu.memory_space<vmem>>, %arg1: memref<3x64x128xf32, #tpu.memory_space<vmem>>, %arg2: memref<3x128x128xf32, #tpu.memory_space<vmem>>, %arg3: memref<1x8xf32, #tpu.memory_space<vmem>>, %arg4: memref<1x8xf32, #tpu.memory_space<vmem>>, %arg5: memref<1x8xf32, #tpu.memory_space<vmem>>, %arg6: memref<1x8xf32, #tpu.memory_space<vmem>>, %arg7: memref<128x8xf32, #tpu.memory_space<vmem>>, %arg8: memref<8x128xf32, #tpu.memory_space<vmem>>, %arg9: memref<32x128xf32, #tpu.memory_space<vmem>>, %arg10: memref<2x18x64xf32, #tpu.memory_space<vmem>>, %arg11: memref<2x18x128xf32, #tpu.memory_space<vmem>>) attributes {dimension_semantics = [], scalar_prefetch = 0 : i64, scratch_operands = 2 : i64, tpu.core_type = #tpu.core_type<tc>} {
    %cst = arith.constant 0.000000e+00 : f32
    %0 = vector.broadcast %cst : f32 to vector<2x18x64xf32>
    %c0 = arith.constant 0 : index
    %c0_0 = arith.constant 0 : index
    %c0_1 = arith.constant 0 : index
    %1 = vector.load %arg10[%c0, %c0_0, %c0_1] : memref<2x18x64xf32, #tpu.memory_space<vmem>>, vector<2x18x64xf32>
    tpu.vector_store %arg10[%c0, %c0_0, %c0_1], %0 {strides = array<i32>} : memref<2x18x64xf32, #tpu.memory_space<vmem>>, vector<2x18x64xf32>,
    %c0_2 = arith.constant 0 : index
    %c0_3 = arith.constant 0 : index
    %c0_4 = arith.constant 0 : index
    %2 = vector.load %arg0[%c0_2, %c0_3, %c0_4] : memref<2x16x64xf32, #tpu.memory_space<vmem>>, vector<2x16x64xf32>
    %c0_5 = arith.constant 0 : index
    %c1 = arith.constant 1 : index
    %c0_6 = arith.constant 0 : index
    %3 = vector.load %arg10[%c0_5, %c1, %c0_6] : memref<2x18x64xf32, #tpu.memory_space<vmem>>, vector<2x16x64xf32>
    tpu.vector_store %arg10[%c0_5, %c1, %c0_6], %2 {strides = array<i32>} : memref<2x18x64xf32, #tpu.memory_space<vmem>>, vector<2x16x64xf32>,
    %cst_7 = arith.constant 0.000000e+00 : f32
    %4 = vector.broadcast %cst_7 : f32 to vector<32x128xf32>
    %c0_8 = arith.constant 0 : index
    %c0_9 = arith.constant 0 : index
    %c0_10 = arith.constant 0 : index
    %5 = vector.load %arg10[%c0_8, %c0_9, %c0_10] : memref<2x18x64xf32, #tpu.memory_space<vmem>>, vector<2x16x64xf32>
    %6 = vector.shape_cast %5 : vector<2x16x64xf32> to vector<32x64xf32>
    %c0_11 = arith.constant 0 : index
    %c0_12 = arith.constant 0 : index
    %c0_13 = arith.constant 0 : index
    %7 = vector.load %arg1[%c0_11, %c0_12, %c0_13] : memref<3x64x128xf32, #tpu.memory_space<vmem>>, vector<1x64x128xf32>
    %8 = vector.shape_cast %7 : vector<1x64x128xf32> to vector<64x128xf32>
    %cst_14 = arith.constant dense<0.000000e+00> : vector<32x128xf32>
    %9 = tpu.matmul %6, %8, %cst_14 {dimension_numbers = #tpu.dot_dimension_numbers<[1], [0], [0], [1], [0, 0, 1, 1], [], []>} : vector<32x64xf32>, vector<64x128xf32>, vector<32x128xf32> -> vector<32x128xf32>
    %10 = arith.addf %4, %9 : vector<32x128xf32>
    %c0_15 = arith.constant 0 : index
    %c1_16 = arith.constant 1 : index
    %c0_17 = arith.constant 0 : index
    %11 = vector.load %arg10[%c0_15, %c1_16, %c0_17] : memref<2x18x64xf32, #tpu.memory_space<vmem>>, vector<2x16x64xf32>
    %12 = vector.shape_cast %11 : vector<2x16x64xf32> to vector<32x64xf32>
    %c1_18 = arith.constant 1 : index
    %c0_19 = arith.constant 0 : index
    %c0_20 = arith.constant 0 : index
    %13 = vector.load %arg1[%c1_18, %c0_19, %c0_20] : memref<3x64x128xf32, #tpu.memory_space<vmem>>, vector<1x64x128xf32>
    %14 = vector.shape_cast %13 : vector<1x64x128xf32> to vector<64x128xf32>
    %cst_21 = arith.constant dense<0.000000e+00> : vector<32x128xf32>
    %15 = tpu.matmul %12, %14, %cst_21 {dimension_numbers = #tpu.dot_dimension_numbers<[1], [0], [0], [1], [0, 0, 1, 1], [], []>} : vector<32x64xf32>, vector<64x128xf32>, vector<32x128xf32> -> vector<32x128xf32>
    %16 = arith.addf %10, %15 : vector<32x128xf32>
    %c0_22 = arith.constant 0 : index
    %c2 = arith.constant 2 : index
    %c0_23 = arith.constant 0 : index
    %17 = vector.load %arg10[%c0_22, %c2, %c0_23] : memref<2x18x64xf32, #tpu.memory_space<vmem>>, vector<2x16x64xf32>
    %18 = vector.shape_cast %17 : vector<2x16x64xf32> to vector<32x64xf32>
    %c2_24 = arith.constant 2 : index
    %c0_25 = arith.constant 0 : index
    %c0_26 = arith.constant 0 : index
    %19 = vector.load %arg1[%c2_24, %c0_25, %c0_26] : memref<3x64x128xf32, #tpu.memory_space<vmem>>, vector<1x64x128xf32>
    %20 = vector.shape_cast %19 : vector<1x64x128xf32> to vector<64x128xf32>
    %cst_27 = arith.constant dense<0.000000e+00> : vector<32x128xf32>
    %21 = tpu.matmul %18, %20, %cst_27 {dimension_numbers = #tpu.dot_dimension_numbers<[1], [0], [0], [1], [0, 0, 1, 1], [], []>} : vector<32x64xf32>, vector<64x128xf32>, vector<32x128xf32> -> vector<32x128xf32>
    %22 = arith.addf %16, %21 : vector<32x128xf32>
    %cst_28 = arith.constant dense<0.000000e+00> : vector<128xf32>
    %23 = vector.multi_reduction <add>, %22, %cst_28 [0] : vector<32x128xf32> to vector<128xf32>
    %24 = vector.shape_cast %23 : vector<128xf32> to vector<1x128xf32>
    %25 = arith.mulf %22, %22 : vector<32x128xf32>
    %cst_29 = arith.constant dense<0.000000e+00> : vector<128xf32>
    %26 = vector.multi_reduction <add>, %25, %cst_29 [0] : vector<32x128xf32> to vector<128xf32>
    %27 = vector.shape_cast %26 : vector<128xf32> to vector<1x128xf32>
    %c0_30 = arith.constant 0 : index
    %c0_31 = arith.constant 0 : index
    %28 = vector.load %arg7[%c0_30, %c0_31] : memref<128x8xf32, #tpu.memory_space<vmem>>, vector<128x8xf32>
    %cst_32 = arith.constant dense<0.000000e+00> : vector<1x8xf32>
    %29 = tpu.matmul %24, %28, %cst_32 {dimension_numbers = #tpu.dot_dimension_numbers<[1], [0], [0], [1], [0, 0, 1, 1], [], []>} : vector<1x128xf32>, vector<128x8xf32>, vector<1x8xf32> -> vector<1x8xf32>
    %c0_33 = arith.constant 0 : index
    %c0_34 = arith.constant 0 : index
    %30 = vector.load %arg7[%c0_33, %c0_34] : memref<128x8xf32, #tpu.memory_space<vmem>>, vector<128x8xf32>
    %cst_35 = arith.constant dense<0.000000e+00> : vector<1x8xf32>
    %31 = tpu.matmul %27, %30, %cst_35 {dimension_numbers = #tpu.dot_dimension_numbers<[1], [0], [0], [1], [0, 0, 1, 1], [], []>} : vector<1x128xf32>, vector<128x8xf32>, vector<1x8xf32> -> vector<1x8xf32>
    %cst_36 = arith.constant 0.001953125 : f32
    %32 = vector.broadcast %cst_36 : f32 to vector<1x8xf32>
    %33 = arith.mulf %29, %32 : vector<1x8xf32>
    %cst_37 = arith.constant 0.001953125 : f32
    %34 = vector.broadcast %cst_37 : f32 to vector<1x8xf32>
    %35 = arith.mulf %31, %34 : vector<1x8xf32>
    %36 = arith.mulf %33, %33 : vector<1x8xf32>
    %37 = arith.subf %35, %36 : vector<1x8xf32>
    %c0_38 = arith.constant 0 : index
    %c0_39 = arith.constant 0 : index
    %38 = vector.load %arg3[%c0_38, %c0_39] : memref<1x8xf32, #tpu.memory_space<vmem>>, vector<1x8xf32>
    %cst_40 = arith.constant 9.99999974E-6 : f32
    %39 = vector.broadcast %cst_40 : f32 to vector<1x8xf32>
    %40 = arith.addf %37, %39 : vector<1x8xf32>
    %41 = math.rsqrt %40 : vector<1x8xf32>
    %42 = arith.mulf %38, %41 : vector<1x8xf32>
    %c0_41 = arith.constant 0 : index
    %c0_42 = arith.constant 0 : index
    %43 = vector.load %arg4[%c0_41, %c0_42] : memref<1x8xf32, #tpu.memory_space<vmem>>, vector<1x8xf32>
    %44 = arith.mulf %33, %42 : vector<1x8xf32>
    %45 = arith.subf %43, %44 : vector<1x8xf32>
    %c0_43 = arith.constant 0 : index
    %c0_44 = arith.constant 0 : index
    %46 = vector.load %arg8[%c0_43, %c0_44] : memref<8x128xf32, #tpu.memory_space<vmem>>, vector<8x128xf32>
    %cst_45 = arith.constant dense<0.000000e+00> : vector<1x128xf32>
    %47 = tpu.matmul %42, %46, %cst_45 {dimension_numbers = #tpu.dot_dimension_numbers<[1], [0], [0], [1], [0, 0, 1, 1], [], []>} : vector<1x8xf32>, vector<8x128xf32>, vector<1x128xf32> -> vector<1x128xf32>
    %c0_46 = arith.constant 0 : index
    %c0_47 = arith.constant 0 : index
    %48 = vector.load %arg8[%c0_46, %c0_47] : memref<8x128xf32, #tpu.memory_space<vmem>>, vector<8x128xf32>
    %cst_48 = arith.constant dense<0.000000e+00> : vector<1x128xf32>
    %49 = tpu.matmul %45, %48, %cst_48 {dimension_numbers = #tpu.dot_dimension_numbers<[1], [0], [0], [1], [0, 0, 1, 1], [], []>} : vector<1x8xf32>, vector<8x128xf32>, vector<1x128xf32> -> vector<1x128xf32>
    %50 = vector.broadcast %47 : vector<1x128xf32> to vector<32x128xf32>
    %51 = arith.mulf %22, %50 : vector<32x128xf32>
    %52 = vector.broadcast %49 : vector<1x128xf32> to vector<32x128xf32>
    %53 = arith.addf %51, %52 : vector<32x128xf32>
    %cst_49 = arith.constant 0.000000e+00 : f32
    %54 = vector.broadcast %cst_49 : f32 to vector<32x128xf32>
    %55 = arith.maximumf %53, %54 : vector<32x128xf32>
    %cst_50 = arith.constant 0.000000e+00 : f32
    %56 = vector.broadcast %cst_50 : f32 to vector<2x18x128xf32>
    %c0_51 = arith.constant 0 : index
    %c0_52 = arith.constant 0 : index
    %c0_53 = arith.constant 0 : index
    %57 = vector.load %arg11[%c0_51, %c0_52, %c0_53] : memref<2x18x128xf32, #tpu.memory_space<vmem>>, vector<2x18x128xf32>
    tpu.vector_store %arg11[%c0_51, %c0_52, %c0_53], %56 {strides = array<i32>} : memref<2x18x128xf32, #tpu.memory_space<vmem>>, vector<2x18x128xf32>,
    %58 = vector.shape_cast %55 : vector<32x128xf32> to vector<2x16x128xf32>
    %c0_54 = arith.constant 0 : index
    %c1_55 = arith.constant 1 : index
    %c0_56 = arith.constant 0 : index
    %59 = vector.load %arg11[%c0_54, %c1_55, %c0_56] : memref<2x18x128xf32, #tpu.memory_space<vmem>>, vector<2x16x128xf32>
    tpu.vector_store %arg11[%c0_54, %c1_55, %c0_56], %58 {strides = array<i32>} : memref<2x18x128xf32, #tpu.memory_space<vmem>>, vector<2x16x128xf32>,
    %cst_57 = arith.constant 0.000000e+00 : f32
    %60 = vector.broadcast %cst_57 : f32 to vector<32x128xf32>
    %c0_58 = arith.constant 0 : index
    %c0_59 = arith.constant 0 : index
    %c0_60 = arith.constant 0 : index
    %61 = vector.load %arg11[%c0_58, %c0_59, %c0_60] : memref<2x18x128xf32, #tpu.memory_space<vmem>>, vector<2x16x128xf32>
    %62 = vector.shape_cast %61 : vector<2x16x128xf32> to vector<32x128xf32>
    %c0_61 = arith.constant 0 : index
    %c0_62 = arith.constant 0 : index
    %c0_63 = arith.constant 0 : index
    %63 = vector.load %arg2[%c0_61, %c0_62, %c0_63] : memref<3x128x128xf32, #tpu.memory_space<vmem>>, vector<1x128x128xf32>
    %64 = vector.shape_cast %63 : vector<1x128x128xf32> to vector<128x128xf32>
    %cst_64 = arith.constant dense<0.000000e+00> : vector<32x128xf32>
    %65 = tpu.matmul %62, %64, %cst_64 {dimension_numbers = #tpu.dot_dimension_numbers<[1], [0], [0], [1], [0, 0, 1, 1], [], []>} : vector<32x128xf32>, vector<128x128xf32>, vector<32x128xf32> -> vector<32x128xf32>
    %66 = arith.addf %60, %65 : vector<32x128xf32>
    %c0_65 = arith.constant 0 : index
    %c1_66 = arith.constant 1 : index
    %c0_67 = arith.constant 0 : index
    %67 = vector.load %arg11[%c0_65, %c1_66, %c0_67] : memref<2x18x128xf32, #tpu.memory_space<vmem>>, vector<2x16x128xf32>
    %68 = vector.shape_cast %67 : vector<2x16x128xf32> to vector<32x128xf32>
    %c1_68 = arith.constant 1 : index
    %c0_69 = arith.constant 0 : index
    %c0_70 = arith.constant 0 : index
    %69 = vector.load %arg2[%c1_68, %c0_69, %c0_70] : memref<3x128x128xf32, #tpu.memory_space<vmem>>, vector<1x128x128xf32>
    %70 = vector.shape_cast %69 : vector<1x128x128xf32> to vector<128x128xf32>
    %cst_71 = arith.constant dense<0.000000e+00> : vector<32x128xf32>
    %71 = tpu.matmul %68, %70, %cst_71 {dimension_numbers = #tpu.dot_dimension_numbers<[1], [0], [0], [1], [0, 0, 1, 1], [], []>} : vector<32x128xf32>, vector<128x128xf32>, vector<32x128xf32> -> vector<32x128xf32>
    %72 = arith.addf %66, %71 : vector<32x128xf32>
    %c0_72 = arith.constant 0 : index
    %c2_73 = arith.constant 2 : index
    %c0_74 = arith.constant 0 : index
    %73 = vector.load %arg11[%c0_72, %c2_73, %c0_74] : memref<2x18x128xf32, #tpu.memory_space<vmem>>, vector<2x16x128xf32>
    %74 = vector.shape_cast %73 : vector<2x16x128xf32> to vector<32x128xf32>
    %c2_75 = arith.constant 2 : index
    %c0_76 = arith.constant 0 : index
    %c0_77 = arith.constant 0 : index
    %75 = vector.load %arg2[%c2_75, %c0_76, %c0_77] : memref<3x128x128xf32, #tpu.memory_space<vmem>>, vector<1x128x128xf32>
    %76 = vector.shape_cast %75 : vector<1x128x128xf32> to vector<128x128xf32>
    %cst_78 = arith.constant dense<0.000000e+00> : vector<32x128xf32>
    %77 = tpu.matmul %74, %76, %cst_78 {dimension_numbers = #tpu.dot_dimension_numbers<[1], [0], [0], [1], [0, 0, 1, 1], [], []>} : vector<32x128xf32>, vector<128x128xf32>, vector<32x128xf32> -> vector<32x128xf32>
    %78 = arith.addf %72, %77 : vector<32x128xf32>
    %cst_79 = arith.constant dense<0.000000e+00> : vector<128xf32>
    %79 = vector.multi_reduction <add>, %78, %cst_79 [0] : vector<32x128xf32> to vector<128xf32>
    %80 = vector.shape_cast %79 : vector<128xf32> to vector<1x128xf32>
    %81 = arith.mulf %78, %78 : vector<32x128xf32>
    %cst_80 = arith.constant dense<0.000000e+00> : vector<128xf32>
    %82 = vector.multi_reduction <add>, %81, %cst_80 [0] : vector<32x128xf32> to vector<128xf32>
    %83 = vector.shape_cast %82 : vector<128xf32> to vector<1x128xf32>
    %c0_81 = arith.constant 0 : index
    %c0_82 = arith.constant 0 : index
    %84 = vector.load %arg7[%c0_81, %c0_82] : memref<128x8xf32, #tpu.memory_space<vmem>>, vector<128x8xf32>
    %cst_83 = arith.constant dense<0.000000e+00> : vector<1x8xf32>
    %85 = tpu.matmul %80, %84, %cst_83 {dimension_numbers = #tpu.dot_dimension_numbers<[1], [0], [0], [1], [0, 0, 1, 1], [], []>} : vector<1x128xf32>, vector<128x8xf32>, vector<1x8xf32> -> vector<1x8xf32>
    %c0_84 = arith.constant 0 : index
    %c0_85 = arith.constant 0 : index
    %86 = vector.load %arg7[%c0_84, %c0_85] : memref<128x8xf32, #tpu.memory_space<vmem>>, vector<128x8xf32>
    %cst_86 = arith.constant dense<0.000000e+00> : vector<1x8xf32>
    %87 = tpu.matmul %83, %86, %cst_86 {dimension_numbers = #tpu.dot_dimension_numbers<[1], [0], [0], [1], [0, 0, 1, 1], [], []>} : vector<1x128xf32>, vector<128x8xf32>, vector<1x8xf32> -> vector<1x8xf32>
    %cst_87 = arith.constant 0.001953125 : f32
    %88 = vector.broadcast %cst_87 : f32 to vector<1x8xf32>
    %89 = arith.mulf %85, %88 : vector<1x8xf32>
    %cst_88 = arith.constant 0.001953125 : f32
    %90 = vector.broadcast %cst_88 : f32 to vector<1x8xf32>
    %91 = arith.mulf %87, %90 : vector<1x8xf32>
    %92 = arith.mulf %89, %89 : vector<1x8xf32>
    %93 = arith.subf %91, %92 : vector<1x8xf32>
    %c0_89 = arith.constant 0 : index
    %c0_90 = arith.constant 0 : index
    %94 = vector.load %arg5[%c0_89, %c0_90] : memref<1x8xf32, #tpu.memory_space<vmem>>, vector<1x8xf32>
    %cst_91 = arith.constant 9.99999974E-6 : f32
    %95 = vector.broadcast %cst_91 : f32 to vector<1x8xf32>
    %96 = arith.addf %93, %95 : vector<1x8xf32>
    %97 = math.rsqrt %96 : vector<1x8xf32>
    %98 = arith.mulf %94, %97 : vector<1x8xf32>
    %c0_92 = arith.constant 0 : index
    %c0_93 = arith.constant 0 : index
    %99 = vector.load %arg6[%c0_92, %c0_93] : memref<1x8xf32, #tpu.memory_space<vmem>>, vector<1x8xf32>
    %100 = arith.mulf %89, %98 : vector<1x8xf32>
    %101 = arith.subf %99, %100 : vector<1x8xf32>
    %c0_94 = arith.constant 0 : index
    %c0_95 = arith.constant 0 : index
    %102 = vector.load %arg8[%c0_94, %c0_95] : memref<8x128xf32, #tpu.memory_space<vmem>>, vector<8x128xf32>
    %cst_96 = arith.constant dense<0.000000e+00> : vector<1x128xf32>
    %103 = tpu.matmul %98, %102, %cst_96 {dimension_numbers = #tpu.dot_dimension_numbers<[1], [0], [0], [1], [0, 0, 1, 1], [], []>} : vector<1x8xf32>, vector<8x128xf32>, vector<1x128xf32> -> vector<1x128xf32>
    %c0_97 = arith.constant 0 : index
    %c0_98 = arith.constant 0 : index
    %104 = vector.load %arg8[%c0_97, %c0_98] : memref<8x128xf32, #tpu.memory_space<vmem>>, vector<8x128xf32>
    %cst_99 = arith.constant dense<0.000000e+00> : vector<1x128xf32>
    %105 = tpu.matmul %101, %104, %cst_99 {dimension_numbers = #tpu.dot_dimension_numbers<[1], [0], [0], [1], [0, 0, 1, 1], [], []>} : vector<1x8xf32>, vector<8x128xf32>, vector<1x128xf32> -> vector<1x128xf32>
    %106 = vector.broadcast %103 : vector<1x128xf32> to vector<32x128xf32>
    %107 = arith.mulf %78, %106 : vector<32x128xf32>
    %108 = vector.broadcast %105 : vector<1x128xf32> to vector<32x128xf32>
    %109 = arith.addf %107, %108 : vector<32x128xf32>
    %cst_100 = arith.constant 0.000000e+00 : f32
    %110 = vector.broadcast %cst_100 : f32 to vector<32x128xf32>
    %111 = arith.maximumf %109, %110 : vector<32x128xf32>
    %c0_101 = arith.constant 0 : index
    %c0_102 = arith.constant 0 : index
    %112 = vector.load %arg9[%c0_101, %c0_102] : memref<32x128xf32, #tpu.memory_space<vmem>>, vector<32x128xf32>
    tpu.vector_store %arg9[%c0_101, %c0_102], %111 {strides = array<i32>} : memref<32x128xf32, #tpu.memory_space<vmem>>, vector<32x128xf32>,
    return
  }
}

</mosaic_0001>

<llo_original>
// kernel: tile.9
$region0: #{tile.9}
  %s0 = inlined_call_operand.vmem [shape: f32[16,8,8], index: 0, kind: input, shape index: {}]
  %s1 = inlined_call_operand.vmem [shape: f32[128,8], index: 1, kind: output, shape index: {}]
  %s2 = smov 3
  %v3 = vld [vmem:[%s0] ss:$16 sm:%s2]
  %s4 = smov 12
  %v5 = vld [vmem:[%s0] ss:$16 sm:%s4]
  %vm6 = vcmask 1043458
  %v7 = vsel %vm6, %v5, %v3
  %s8 = smov 48
  %v9 = vld [vmem:[%s0] ss:$16 sm:%s8]
  %vm10 = vcmask 1045508
  %v11 = vsel %vm10, %v9, %v7
  %s12 = smov 192
  %v13 = vld [vmem:[%s0] ss:$16 sm:%s12]
  %vm14 = vcmask 1047558
  %v15 = vsel %vm14, %v13, %v11
  %vm16 = vcmask 64512
  %17 = vst.msk [vmem:[%s1] sm:$0xff] %vm16, %v15
  %s18 = scalar_lea.vmem %s0, 15
  %s19 = smov 3
  %v20 = vld [vmem:[%s18] ss:$16 sm:%s19]
  %s21 = scalar_lea.vmem %s0, 15
  %s22 = smov 12
  %v23 = vld [vmem:[%s21] ss:$16 sm:%s22]
  %vm24 = vcmask 1043458
  %v25 = vsel %vm24, %v23, %v20
  %s26 = scalar_lea.vmem %s0, 15
  %s27 = smov 48
  %v28 = vld [vmem:[%s26] ss:$16 sm:%s27]
  %vm29 = vcmask 1045508
  %v30 = vsel %vm29, %v28, %v25
  %s31 = scalar_lea.vmem %s0, 15
  %s32 = smov 192
  %v33 = vld [vmem:[%s31] ss:$16 sm:%s32]
  %vm34 = vcmask 1047558
  %v35 = vsel %vm34, %v33, %v30
  %36 = vrot.lane.b32.xlu0 %v35, 120
  %v37 = vpop.permute.xlu0 %36
  %vm38 = vcmask 1048512
  %39 = vst.msk [vmem:[%s1] sm:$0xff] %vm38, %v37
  %s40 = scalar_lea.vmem %s0, 14
  %s41 = smov 3
  %v42 = vld [vmem:[%s40] ss:$16 sm:%s41]
  %s43 = scalar_lea.vmem %s0, 14
  %s44 = smov 12
  %v45 = vld [vmem:[%s43] ss:$16 sm:%s44]
  %vm46 = vcmask 1043458
  %v47 = vsel %vm46, %v45, %v42
  %s48 = scalar_lea.vmem %s0, 14
  %s49 = smov 48
  %v50 = vld [vmem:[%s48] ss:$16 sm:%s49]
  %vm51 = vcmask 1045508
  %v52 = vsel %vm51, %v50, %v47
  %s53 = scalar_lea.vmem %s0, 14
  %s54 = smov 192
  %v55 = vld [vmem:[%s53] ss:$16 sm:%s54]
  %vm56 = vcmask 1047558
  %v57 = vsel %vm56, %v55, %v52
  %58 = vrot.lane.b32.xlu0 %v57, 112
  %v59 = vpop.permute.xlu0 %58
  %vm60 = vcmask 982912
  %61 = vst.msk [vmem:[%s1] sm:$0xff] %vm60, %v59
  %s62 = scalar_lea.vmem %s0, 13
  %s63 = smov 3
  %v64 = vld [vmem:[%s62] ss:$16 sm:%s63]
  %s65 = scalar_lea.vmem %s0, 13
  %s66 = smov 12
  %v67 = vld [vmem:[%s65] ss:$16 sm:%s66]
  %vm68 = vcmask 1043458
  %v69 = vsel %vm68, %v67, %v64
  %s70 = scalar_lea.vmem %s0, 13
  %s71 = smov 48
  %v72 = vld [vmem:[%s70] ss:$16 sm:%s71]
  %vm73 = vcmask 1045508
  %v74 = vsel %vm73, %v72, %v69
  %s75 = scalar_lea.vmem %s0, 13
  %s76 = smov 192
  %v77 = vld [vmem:[%s75] ss:$16 sm:%s76]
  %vm78 = vcmask 1047558
  %v79 = vsel %vm78, %v77, %v74
  %80 = vrot.lane.b32.xlu0 %v79, 104
  %v81 = vpop.permute.xlu0 %80
  %vm82 = vcmask 917312
  %83 = vst.msk [vmem:[%s1] sm:$0xff] %vm82, %v81
  %s84 = scalar_lea.vmem %s0, 12
  %s85 = smov 3
  %v86 = vld [vmem:[%s84] ss:$16 sm:%s85]
  %s87 = scalar_lea.vmem %s0, 12
  %s88 = smov 12
  %v89 = vld [vmem:[%s87] ss:$16 sm:%s88]
  %vm90 = vcmask 1043458
  %v91 = vsel %vm90, %v89, %v86
  %s92 = scalar_lea.vmem %s0, 12
  %s93 = smov 48
  %v94 = vld [vmem:[%s92] ss:$16 sm:%s93]
  %vm95 = vcmask 1045508
  %v96 = vsel %vm95, %v94, %v91
  %s97 = scalar_lea.vmem %s0, 12
  %s98 = smov 192
  %v99 = vld [vmem:[%s97] ss:$16 sm:%s98]
  %vm100 = vcmask 1047558
  %v101 = vsel %vm100, %v99, %v96
  %102 = vrot.lane.b32.xlu0 %v101, 96
  %v103 = vpop.permute.xlu0 %102
  %vm104 = vcmask 851712
  %105 = vst.msk [vmem:[%s1] sm:$0xff] %vm104, %v103
  %s106 = scalar_lea.vmem %s0, 11
  %s107 = smov 3
  %v108 = vld [vmem:[%s106] ss:$16 sm:%s107]
  %s109 = scalar_lea.vmem %s0, 11
  %s110 = smov 12
  %v111 = vld [vmem:[%s109] ss:$16 sm:%s110]
  %vm112 = vcmask 1043458
  %v113 = vsel %vm112, %v111, %v108
  %s114 = scalar_lea.vmem %s0, 11
  %s115 = smov 48
  %v116 = vld [vmem:[%s114] ss:$16 sm:%s115]
  %vm117 = vcmask 1045508
  %v118 = vsel %vm117, %v116, %v113
  %s119 = scalar_lea.vmem %s0, 11
  %s120 = smov 192
  %v121 = vld [vmem:[%s119] ss:$16 sm:%s120]
  %vm122 = vcmask 1047558
  %v123 = vsel %vm122, %v121, %v118
  %124 = vrot.lane.b32.xlu0 %v123, 88
  %v125 = vpop.permute.xlu0 %124
  %vm126 = vcmask 786112
  %127 = vst.msk [vmem:[%s1] sm:$0xff] %vm126, %v125
  %s128 = scalar_lea.vmem %s0, 10
  %s129 = smov 3
  %v130 = vld [vmem:[%s128] ss:$16 sm:%s129]
  %s131 = scalar_lea.vmem %s0, 10
  %s132 = smov 12
  %v133 = vld [vmem:[%s131] ss:$16 sm:%s132]
  %vm134 = vcmask 1043458
  %v135 = vsel %vm134, %v133, %v130
  %s136 = scalar_lea.vmem %s0, 10
  %s137 = smov 48
  %v138 = vld [vmem:[%s136] ss:$16 sm:%s137]
  %vm139 = vcmask 1045508
  %v140 = vsel %vm139, %v138, %v135
  %s141 = scalar_lea.vmem %s0, 10
  %s142 = smov 192
  %v143 = vld [vmem:[%s141] ss:$16 sm:%s142]
  %vm144 = vcmask 1047558
  %v145 = vsel %vm144, %v143, %v140
  %146 = vrot.lane.b32.xlu0 %v145, 80
  %v147 = vpop.permute.xlu0 %146
  %vm148 = vcmask 720512
  %149 = vst.msk [vmem:[%s1] sm:$0xff] %vm148, %v147
  %s150 = scalar_lea.vmem %s0, 9
  %s151 = smov 3
  %v152 = vld [vmem:[%s150] ss:$16 sm:%s151]
  %s153 = scalar_lea.vmem %s0, 9
  %s154 = smov 12
  %v155 = vld [vmem:[%s153] ss:$16 sm:%s154]
  %vm156 = vcmask 1043458
  %v157 = vsel %vm156, %v155, %v152
  %s158 = scalar_lea.vmem %s0, 9
  %s159 = smov 48
  %v160 = vld [vmem:[%s158] ss:$16 sm:%s159]
  %vm161 = vcmask 1045508
  %v162 = vsel %vm161, %v160, %v157
  %s163 = scalar_lea.vmem %s0, 9
  %s164 = smov 192
  %v165 = vld [vmem:[%s163] ss:$16 sm:%s164]
  %vm166 = vcmask 1047558
  %v167 = vsel %vm166, %v165, %v162
  %168 = vrot.lane.b32.xlu0 %v167, 72
  %v169 = vpop.permute.xlu0 %168
  %vm170 = vcmask 654912
  %171 = vst.msk [vmem:[%s1] sm:$0xff] %vm170, %v169
  %s172 = scalar_lea.vmem %s0, 8
  %s173 = smov 3
  %v174 = vld [vmem:[%s172] ss:$16 sm:%s173]
  %s175 = scalar_lea.vmem %s0, 8
  %s176 = smov 12
  %v177 = vld [vmem:[%s175] ss:$16 sm:%s176]
  %vm178 = vcmask 1043458
  %v179 = vsel %vm178, %v177, %v174
  %s180 = scalar_lea.vmem %s0, 8
  %s181 = smov 48
  %v182 = vld [vmem:[%s180] ss:$16 sm:%s181]
  %vm183 = vcmask 1045508
  %v184 = vsel %vm183, %v182, %v179
  %s185 = scalar_lea.vmem %s0, 8
  %s186 = smov 192
  %v187 = vld [vmem:[%s185] ss:$16 sm:%s186]
  %vm188 = vcmask 1047558
  %v189 = vsel %vm188, %v187, %v184
  %190 = vrot.lane.b32.xlu0 %v189, 64
  %v191 = vpop.permute.xlu0 %190
  %vm192 = vcmask 589312
  %193 = vst.msk [vmem:[%s1] sm:$0xff] %vm192, %v191
  %s194 = scalar_lea.vmem %s0, 7
  %s195 = smov 3
  %v196 = vld [vmem:[%s194] ss:$16 sm:%s195]
  %s197 = scalar_lea.vmem %s0, 7
  %s198 = smov 12
  %v199 = vld [vmem:[%s197] ss:$16 sm:%s198]
  %vm200 = vcmask 1043458
  %v201 = vsel %vm200, %v199, %v196
  %s202 = scalar_lea.vmem %s0, 7
  %s203 = smov 48
  %v204 = vld [vmem:[%s202] ss:$16 sm:%s203]
  %vm205 = vcmask 1045508
  %v206 = vsel %vm205, %v204, %v201
  %s207 = scalar_lea.vmem %s0, 7
  %s208 = smov 192
  %v209 = vld [vmem:[%s207] ss:$16 sm:%s208]
  %vm210 = vcmask 1047558
  %v211 = vsel %vm210, %v209, %v206
  %212 = vrot.lane.b32.xlu0 %v211, 56
  %v213 = vpop.permute.xlu0 %212
  %vm214 = vcmask 523712
  %215 = vst.msk [vmem:[%s1] sm:$0xff] %vm214, %v213
  %s216 = scalar_lea.vmem %s0, 6
  %s217 = smov 3
  %v218 = vld [vmem:[%s216] ss:$16 sm:%s217]
  %s219 = scalar_lea.vmem %s0, 6
  %s220 = smov 12
  %v221 = vld [vmem:[%s219] ss:$16 sm:%s220]
  %vm222 = vcmask 1043458
  %v223 = vsel %vm222, %v221, %v218
  %s224 = scalar_lea.vmem %s0, 6
  %s225 = smov 48
  %v226 = vld [vmem:[%s224] ss:$16 sm:%s225]
  %vm227 = vcmask 1045508
  %v228 = vsel %vm227, %v226, %v223
  %s229 = scalar_lea.vmem %s0, 6
  %s230 = smov 192
  %v231 = vld [vmem:[%s229] ss:$16 sm:%s230]
  %vm232 = vcmask 1047558
  %v233 = vsel %vm232, %v231, %v228
  %234 = vrot.lane.b32.xlu0 %v233, 48
  %v235 = vpop.permute.xlu0 %234
  %vm236 = vcmask 458112
  %237 = vst.msk [vmem:[%s1] sm:$0xff] %vm236, %v235
  %s238 = scalar_lea.vmem %s0, 5
  %s239 = smov 3
  %v240 = vld [vmem:[%s238] ss:$16 sm:%s239]
  %s241 = scalar_lea.vmem %s0, 5
  %s242 = smov 12
  %v243 = vld [vmem:[%s241] ss:$16 sm:%s242]
  %vm244 = vcmask 1043458
  %v245 = vsel %vm244, %v243, %v240
  %s246 = scalar_lea.vmem %s0, 5
  %s247 = smov 48
  %v248 = vld [vmem:[%s246] ss:$16 sm:%s247]
  %vm249 = vcmask 1045508
  %v250 = vsel %vm249, %v248, %v245
  %s251 = scalar_lea.vmem %s0, 5
  %s252 = smov 192
  %v253 = vld [vmem:[%s251] ss:$16 sm:%s252]
  %vm254 = vcmask 1047558
  %v255 = vsel %vm254, %v253, %v250
  %256 = vrot.lane.b32.xlu0 %v255, 40
  %v257 = vpop.permute.xlu0 %256
  %vm258 = vcmask 392512
  %259 = vst.msk [vmem:[%s1] sm:$0xff] %vm258, %v257
  %s260 = scalar_lea.vmem %s0, 4
  %s261 = smov 3
  %v262 = vld [vmem:[%s260] ss:$16 sm:%s261]
  %s263 = scalar_lea.vmem %s0, 4
  %s264 = smov 12
  %v265 = vld [vmem:[%s263] ss:$16 sm:%s264]
  %vm266 = vcmask 1043458
  %v267 = vsel %vm266, %v265, %v262
  %s268 = scalar_lea.vmem %s0, 4
  %s269 = smov 48
  %v270 = vld [vmem:[%s268] ss:$16 sm:%s269]
  %vm271 = vcmask 1045508
  %v272 = vsel %vm271, %v270, %v267
  %s273 = scalar_lea.vmem %s0, 4
  %s274 = smov 192
  %v275 = vld [vmem:[%s273] ss:$16 sm:%s274]
  %vm276 = vcmask 1047558
  %v277 = vsel %vm276, %v275, %v272
  %278 = vrot.lane.b32.xlu0 %v277, 32
  %v279 = vpop.permute.xlu0 %278
  %vm280 = vcmask 326912
  %281 = vst.msk [vmem:[%s1] sm:$0xff] %vm280, %v279
  %s282 = scalar_lea.vmem %s0, 3
  %s283 = smov 3
  %v284 = vld [vmem:[%s282] ss:$16 sm:%s283]
  %s285 = scalar_lea.vmem %s0, 3
  %s286 = smov 12
  %v287 = vld [vmem:[%s285] ss:$16 sm:%s286]
  %vm288 = vcmask 1043458
  %v289 = vsel %vm288, %v287, %v284
  %s290 = scalar_lea.vmem %s0, 3
  %s291 = smov 48
  %v292 = vld [vmem:[%s290] ss:$16 sm:%s291]
  %vm293 = vcmask 1045508
  %v294 = vsel %vm293, %v292, %v289
  %s295 = scalar_lea.vmem %s0, 3
  %s296 = smov 192
  %v297 = vld [vmem:[%s295] ss:$16 sm:%s296]
  %vm298 = vcmask 1047558
  %v299 = vsel %vm298, %v297, %v294
  %300 = vrot.lane.b32.xlu0 %v299, 24
  %v301 = vpop.permute.xlu0 %300
  %vm302 = vcmask 261312
  %303 = vst.msk [vmem:[%s1] sm:$0xff] %vm302, %v301
  %s304 = scalar_lea.vmem %s0, 2
  %s305 = smov 3
  %v306 = vld [vmem:[%s304] ss:$16 sm:%s305]
  %s307 = scalar_lea.vmem %s0, 2
  %s308 = smov 12
  %v309 = vld [vmem:[%s307] ss:$16 sm:%s308]
  %vm310 = vcmask 1043458
  %v311 = vsel %vm310, %v309, %v306
  %s312 = scalar_lea.vmem %s0, 2
  %s313 = smov 48
  %v314 = vld [vmem:[%s312] ss:$16 sm:%s313]
  %vm315 = vcmask 1045508
  %v316 = vsel %vm315, %v314, %v311
  %s317 = scalar_lea.vmem %s0, 2
  %s318 = smov 192
  %v319 = vld [vmem:[%s317] ss:$16 sm:%s318]
  %vm320 = vcmask 1047558
  %v321 = vsel %vm320, %v319, %v316
  %322 = vrot.lane.b32.xlu0 %v321, 16
  %v323 = vpop.permute.xlu0 %322
  %vm324 = vcmask 195712
  %325 = vst.msk [vmem:[%s1] sm:$0xff] %vm324, %v323
  %s326 = scalar_lea.vmem %s0, 1
  %s327 = smov 3
  %v328 = vld [vmem:[%s326] ss:$16 sm:%s327]
  %s329 = scalar_lea.vmem %s0, 1
  %s330 = smov 12
  %v331 = vld [vmem:[%s329] ss:$16 sm:%s330]
  %vm332 = vcmask 1043458
  %v333 = vsel %vm332, %v331, %v328
  %s334 = scalar_lea.vmem %s0, 1
  %s335 = smov 48
  %v336 = vld [vmem:[%s334] ss:$16 sm:%s335]
  %vm337 = vcmask 1045508
  %v338 = vsel %vm337, %v336, %v333
  %s339 = scalar_lea.vmem %s0, 1
  %s340 = smov 192
  %v341 = vld [vmem:[%s339] ss:$16 sm:%s340]
  %vm342 = vcmask 1047558
  %v343 = vsel %vm342, %v341, %v338
  %344 = vrot.lane.b32.xlu0 %v343, 8
  %v345 = vpop.permute.xlu0 %344
  %vm346 = vcmask 130112
  %347 = vst.msk [vmem:[%s1] sm:$0xff] %vm346, %v345

// kernel: conv_block_3_forward.1
$region0: #{conv_block_3_forward.1}
  #allocation0 [shape = 'u32[]', space=smem, size = 0x4, offset = 0x4, fixed_abs, tag = 'smem constant byte address 0x4 - core index']
  #allocation1 [shape = 'u32[72,128]{1,0:T(1,128)}', space=vmem, size = 0x9000, scoped, tag = 'internal scratch']
  #allocation2 [shape = 'f32[2,18,64]{2,1,0:T(8,128)}', space=vmem, size = 0x6000, scoped, tag = 'scratch operand']
  #allocation3 [shape = 'f32[2,18,128]{2,1,0:T(8,128)}', space=vmem, size = 0x6000, scoped, tag = 'scratch operand']
  %s0 = inlined_call_operand.vmem [shape: f32[2,16,64], index: 0, kind: input, shape index: {}]
  %s1 = inlined_call_operand.vmem [shape: f32[3,64,128], index: 1, kind: input, shape index: {}]
  %s2 = inlined_call_operand.vmem [shape: f32[3,128,128], index: 2, kind: input, shape index: {}]
  %s3 = inlined_call_operand.vmem [shape: f32[1,8], index: 3, kind: input, shape index: {}]
  %s4 = inlined_call_operand.vmem [shape: f32[1,8], index: 4, kind: input, shape index: {}]
  %s5 = inlined_call_operand.vmem [shape: f32[1,8], index: 5, kind: input, shape index: {}]
  %s6 = inlined_call_operand.vmem [shape: f32[1,8], index: 6, kind: input, shape index: {}]
  %s7 = inlined_call_operand.vmem [shape: f32[128,8], index: 7, kind: input, shape index: {}]
  %s8 = inlined_call_operand.vmem [shape: f32[8,128], index: 8, kind: input, shape index: {}]
  %s9 = inlined_call_operand.vmem [shape: f32[32,128], index: 9, kind: output, shape index: {}]
  %s10 = sld [smem:[#allocation0]]
  $region46: #{conv_block_3_forward.1} parent=0
    _
  %s12 = ssub.s32 1, %s10
  %s13 = scalar_select 0, %s12, %s10
  // Predicated region
  $region2: #{conv_block_3_forward.1} parent=0 // pred_check
    _
  $region3: #{conv_block_3_forward.1} parent=0 // pred_check_branch
    %15 = sbr.rel (0) target = $region5
  $region4: #{conv_block_3_forward.1} parent=0 // pred_region
    _
  $region5: #{conv_block_3_forward.1} parent=0 // pred_fallthru
    _
  // Predicated region
  $region6: #{conv_block_3_forward.1} parent=0 // pred_check
    _
  $region7: #{conv_block_3_forward.1} parent=0 // pred_check_branch
    %17 = sbr.rel (0) target = $region9
  $region8: #{conv_block_3_forward.1} parent=0 // pred_region
    _
  $region9: #{conv_block_3_forward.1} parent=0 // pred_fallthru
    _
  // Predicated region
  $region10: #{conv_block_3_forward.1} parent=0 // pred_check
    _
  $region11: #{conv_block_3_forward.1} parent=0 // pred_check_branch
    %19 = sbr.rel (0) target = $region13
  $region12: #{conv_block_3_forward.1} parent=0 // pred_region
    _
  $region13: #{conv_block_3_forward.1} parent=0 // pred_fallthru
    _
  // Predicated region
  $region14: #{conv_block_3_forward.1} parent=0 // pred_check
    _
  $region15: #{conv_block_3_forward.1} parent=0 // pred_check_branch
    %21 = sbr.rel (0) target = $region17
  $region16: #{conv_block_3_forward.1} parent=0 // pred_region
    _
  $region17: #{conv_block_3_forward.1} parent=0 // pred_fallthru
    _
  // Predicated region
  $region18: #{conv_block_3_forward.1} parent=0 // pred_check
    _
  $region19: #{conv_block_3_forward.1} parent=0 // pred_check_branch
    %23 = sbr.rel (0) target = $region21
  $region20: #{conv_block_3_forward.1} parent=0 // pred_region
    _
  $region21: #{conv_block_3_forward.1} parent=0 // pred_fallthru
    _
  // Predicated region
  $region22: #{conv_block_3_forward.1} parent=0 // pred_check
    _
  $region23: #{conv_block_3_forward.1} parent=0 // pred_check_branch
    %25 = sbr.rel (0) target = $region25
  $region24: #{conv_block_3_forward.1} parent=0 // pred_region
    _
  $region25: #{conv_block_3_forward.1} parent=0 // pred_fallthru
    _
  // Predicated region
  $region26: #{conv_block_3_forward.1} parent=0 // pred_check
    _
  $region27: #{conv_block_3_forward.1} parent=0 // pred_check_branch
    %27 = sbr.rel (0) target = $region29
  $region28: #{conv_block_3_forward.1} parent=0 // pred_region
    _
  $region29: #{conv_block_3_forward.1} parent=0 // pred_fallthru
    _
  // Predicated region
  $region30: #{conv_block_3_forward.1} parent=0 // pred_check
    _
  $region31: #{conv_block_3_forward.1} parent=0 // pred_check_branch
    %29 = sbr.rel (0) target = $region33
  $region32: #{conv_block_3_forward.1} parent=0 // pred_region
    _
  $region33: #{conv_block_3_forward.1} parent=0 // pred_fallthru
    _
  // Predicated region
  $region34: #{conv_block_3_forward.1} parent=0 // pred_check
    _
  $region35: #{conv_block_3_forward.1} parent=0 // pred_check_branch
    %31 = sbr.rel (0) target = $region37
  $region36: #{conv_block_3_forward.1} parent=0 // pred_region
    _
  $region37: #{conv_block_3_forward.1} parent=0 // pred_fallthru
    _
  %vm32 = vcmask 523264
  %33 = vst.msk [vmem:[#allocation2] sm:$0xff] %vm32, 0.0
  %34 = vst.msk [vmem:[#allocation2 + $0x8] sm:$0xff] %vm32, 0.0
  %vm35 = vcmask 517120
  %36 = vst.msk [vmem:[#allocation2 + $0x10] sm:$0x3] %vm35, 0.0
  %37 = vst.msk [vmem:[#allocation2 + $0x18] sm:$0xff] %vm32, 0.0
  %38 = vst.msk [vmem:[#allocation2 + $0x20] sm:$0xff] %vm32, 0.0
  %39 = vst.msk [vmem:[#allocation2 + $0x28] sm:$0x3] %vm35, 0.0
  %v40 = vld [vmem:[%s0] sm:$0xff]
  %v41 = vld [vmem:[%s0 + $0x8] sm:$0xff]
  %v42 = vld [vmem:[%s0 + $0x10] sm:$0xff]
  %v43 = vld [vmem:[%s0 + $0x18] sm:$0xff]
  %44 = vst.msk [vmem:[#allocation2 + $0x1] sm:$0xff] %vm32, %v40
  %45 = vst.msk [vmem:[#allocation2 + $0x9] sm:$0xff] %vm32, %v41
  %46 = vst.msk [vmem:[#allocation2 + $0x19] sm:$0xff] %vm32, %v42
  %47 = vst.msk [vmem:[#allocation2 + $0x21] sm:$0xff] %vm32, %v43
  %v48 = vld [vmem:[#allocation2] sm:$0xff]
  %v49 = vld [vmem:[#allocation2 + $0x8] sm:$0xff]
  %v50 = vld [vmem:[#allocation2 + $0x18] sm:$0xff]
  %v51 = vld [vmem:[#allocation2 + $0x20] sm:$0xff]
  %v52 = vld [vmem:[%s1] sm:$0xff]
  %v53 = vld [vmem:[%s1 + $0x8] sm:$0xff]
  %v54 = vld [vmem:[%s1 + $0x10] sm:$0xff]
  %v55 = vld [vmem:[%s1 + $0x18] sm:$0xff]
  %v56 = vld [vmem:[%s1 + $0x20] sm:$0xff]
  %v57 = vld [vmem:[%s1 + $0x28] sm:$0xff]
  %v58 = vld [vmem:[%s1 + $0x30] sm:$0xff]
  %v59 = vld [vmem:[%s1 + $0x38] sm:$0xff]
  %v60 = vld [vmem:[#allocation2 + $0x1] sm:$0xff]
  %v61 = vld [vmem:[#allocation2 + $0x9] sm:$0xff]
  %v62 = vld [vmem:[#allocation2 + $0x19] sm:$0xff]
  %v63 = vld [vmem:[#allocation2 + $0x21] sm:$0xff]
  %s64 = scalar_lea.vmem %s1, 64
  %v65 = vld [vmem:[%s64] sm:$0xff]
  %v66 = vld [vmem:[%s64 + $0x8] sm:$0xff]
  %v67 = vld [vmem:[%s64 + $0x10] sm:$0xff]
  %v68 = vld [vmem:[%s64 + $0x18] sm:$0xff]
  %v69 = vld [vmem:[%s64 + $0x20] sm:$0xff]
  %v70 = vld [vmem:[%s64 + $0x28] sm:$0xff]
  %v71 = vld [vmem:[%s64 + $0x30] sm:$0xff]
  %v72 = vld [vmem:[%s64 + $0x38] sm:$0xff]
  %v74 = vsel %vm32, %v60, 0
  %v77 = vsel %vm32, %v61, 0
  %v80 = vsel %vm32, %v62, 0
  %v83 = vsel %vm32, %v63, 0
  %85 = vmatpush.msra.mxu0 0.0
  %86 = vmatpush.msra.mxu0 0.0
  %87 = vmatpush.msra.mxu0 0.0
  %88 = vmatpush.msra.mxu0 0.0
  %89 = vmatpush.msra.mxu0 0.0
  %90 = vmatpush.msra.mxu0 0.0
  %91 = vmatpush.msra.mxu0 0.0
  %92 = vmatpush.msra.mxu0 0.0
  %93 = vmatpush.msra.mxu0 %v72
  %94 = vmatpush.msra.mxu0 %v71
  %95 = vmatpush.msra.mxu0 %v70
  %96 = vmatpush.msra.mxu0 %v69
  %97 = vmatpush.msra.mxu0 %v68
  %98 = vmatpush.msra.mxu0 %v67
  %99 = vmatpush.msra.mxu0 %v66
  %100 = vmatpush.msra.mxu0 %v65
  %101 = vmatmul.f32.gmra.mxu0 %v74
  %v102 = vpop.f32.mrf.mxu0
  %v103 = vadd.f32 0.0, %v102
  %104 = vmatmul.f32.gmra.mxu0 %v77
  %v105 = vpop.f32.mrf.mxu0
  %v106 = vadd.f32 0.0, %v105
  %107 = vmatmul.f32.gmra.mxu0 %v80
  %v108 = vpop.f32.mrf.mxu0
  %v109 = vadd.f32 0.0, %v108
  %110 = vmatmul.f32.gmra.mxu0 %v83
  %v111 = vpop.f32.mrf.mxu0
  %v112 = vadd.f32 0.0, %v111
  %113 = vdwg.mxu0
  %v115 = vsel %vm32, %v48, 0
  %v118 = vsel %vm32, %v49, 0
  %v121 = vsel %vm32, %v50, 0
  %v124 = vsel %vm32, %v51, 0
  %126 = vmatpush.msra.mxu0 0.0
  %127 = vmatpush.msra.mxu0 0.0
  %128 = vmatpush.msra.mxu0 0.0
  %129 = vmatpush.msra.mxu0 0.0
  %130 = vmatpush.msra.mxu0 0.0
  %131 = vmatpush.msra.mxu0 0.0
  %132 = vmatpush.msra.mxu0 0.0
  %133 = vmatpush.msra.mxu0 0.0
  %134 = vmatpush.msra.mxu0 %v59
  %135 = vmatpush.msra.mxu0 %v58
  %136 = vmatpush.msra.mxu0 %v57
  %137 = vmatpush.msra.mxu0 %v56
  %138 = vmatpush.msra.mxu0 %v55
  %139 = vmatpush.msra.mxu0 %v54
  %140 = vmatpush.msra.mxu0 %v53
  %141 = vmatpush.msra.mxu0 %v52
  %142 = vmatmul.f32.gmra.mxu0 %v115
  %v143 = vpop.f32.mrf.mxu0
  %v144 = vadd.f32 %v103, %v143
  %145 = vmatmul.f32.gmra.mxu0 %v118
  %v146 = vpop.f32.mrf.mxu0
  %v147 = vadd.f32 %v106, %v146
  %148 = vmatmul.f32.gmra.mxu0 %v121
  %v149 = vpop.f32.mrf.mxu0
  %v150 = vadd.f32 %v109, %v149
  %151 = vmatmul.f32.gmra.mxu0 %v124
  %v152 = vpop.f32.mrf.mxu0
  %v153 = vadd.f32 %v112, %v152
  %154 = vdwg.mxu0
  %v155 = vld [vmem:[#allocation2 + $0x2] sm:$0xff]
  %v156 = vld [vmem:[#allocation2 + $0xa] sm:$0xff]
  %v157 = vld [vmem:[#allocation2 + $0x1a] sm:$0xff]
  %v158 = vld [vmem:[#allocation2 + $0x22] sm:$0xff]
  %s159 = scalar_lea.vmem %s1, 128
  %v160 = vld [vmem:[%s159] sm:$0xff]
  %v161 = vld [vmem:[%s159 + $0x8] sm:$0xff]
  %v162 = vld [vmem:[%s159 + $0x10] sm:$0xff]
  %v163 = vld [vmem:[%s159 + $0x18] sm:$0xff]
  %v164 = vld [vmem:[%s159 + $0x20] sm:$0xff]
  %v165 = vld [vmem:[%s159 + $0x28] sm:$0xff]
  %v166 = vld [vmem:[%s159 + $0x30] sm:$0xff]
  %v167 = vld [vmem:[%s159 + $0x38] sm:$0xff]
  %v169 = vsel %vm32, %v155, 0
  %v172 = vsel %vm32, %v156, 0
  %v175 = vsel %vm32, %v157, 0
  %v178 = vsel %vm32, %v158, 0
  %180 = vmatpush.msra.mxu0 0.0
  %181 = vmatpush.msra.mxu0 0.0
  %182 = vmatpush.msra.mxu0 0.0
  %183 = vmatpush.msra.mxu0 0.0
  %184 = vmatpush.msra.mxu0 0.0
  %185 = vmatpush.msra.mxu0 0.0
  %186 = vmatpush.msra.mxu0 0.0
  %187 = vmatpush.msra.mxu0 0.0
  %188 = vmatpush.msra.mxu0 %v167
  %189 = vmatpush.msra.mxu0 %v166
  %190 = vmatpush.msra.mxu0 %v165
  %191 = vmatpush.msra.mxu0 %v164
  %192 = vmatpush.msra.mxu0 %v163
  %193 = vmatpush.msra.mxu0 %v162
  %194 = vmatpush.msra.mxu0 %v161
  %195 = vmatpush.msra.mxu0 %v160
  %196 = vmatmul.f32.gmra.mxu0 %v169
  %v197 = vpop.f32.mrf.mxu0
  %v198 = vadd.f32 0.0, %v197
  %199 = vmatmul.f32.gmra.mxu0 %v172
  %v200 = vpop.f32.mrf.mxu0
  %v201 = vadd.f32 0.0, %v200
  %202 = vmatmul.f32.gmra.mxu0 %v175
  %v203 = vpop.f32.mrf.mxu0
  %v204 = vadd.f32 0.0, %v203
  %205 = vmatmul.f32.gmra.mxu0 %v178
  %v206 = vpop.f32.mrf.mxu0
  %v207 = vadd.f32 0.0, %v206
  %208 = vdwg.mxu0
  %v209 = vadd.f32 %v144, %v198
  %v210 = vadd.f32 %v147, %v201
  %v211 = vadd.f32 %v150, %v204
  %v212 = vadd.f32 %v153, %v207
  %v213 = vadd.f32 %v209, %v210
  %v214 = vadd.f32 %v213, %v211
  %v215 = vadd.f32 %v214, %v212
  %v216 = vrot.slane %v215, 4
  %v217 = vadd.f32 %v215, %v216
  %v218 = vrot.slane %v217, 2
  %v219 = vadd.f32 %v217, %v218
  %v220 = vrot.slane %v219, 1
  %v221 = vadd.f32 %v219, %v220
  %v222 = vmul.f32 %v209, %v209
  %v223 = vmul.f32 %v210, %v210
  %v224 = vmul.f32 %v211, %v211
  %v225 = vmul.f32 %v212, %v212
  %v226 = vadd.f32 %v222, %v223
  %v227 = vadd.f32 %v226, %v224
  %v228 = vadd.f32 %v227, %v225
  %v229 = vrot.slane %v228, 4
  %v230 = vadd.f32 %v228, %v229
  %v231 = vrot.slane %v230, 2
  %v232 = vadd.f32 %v230, %v231
  %v233 = vrot.slane %v232, 1
  %v234 = vadd.f32 %v232, %v233
  %v235 = vld [vmem:[%s7] sm:$0xff]
  %v236 = vld [vmem:[%s7 + $0x8] sm:$0xff]
  %v237 = vld [vmem:[%s7 + $0x10] sm:$0xff]
  %v238 = vld [vmem:[%s7 + $0x18] sm:$0xff]
  %v239 = vld [vmem:[%s7 + $0x20] sm:$0xff]
  %v240 = vld [vmem:[%s7 + $0x28] sm:$0xff]
  %v241 = vld [vmem:[%s7 + $0x30] sm:$0xff]
  %v242 = vld [vmem:[%s7 + $0x38] sm:$0xff]
  %v243 = vld [vmem:[%s7 + $0x40] sm:$0xff]
  %v244 = vld [vmem:[%s7 + $0x48] sm:$0xff]
  %v245 = vld [vmem:[%s7 + $0x50] sm:$0xff]
  %v246 = vld [vmem:[%s7 + $0x58] sm:$0xff]
  %v247 = vld [vmem:[%s7 + $0x60] sm:$0xff]
  %v248 = vld [vmem:[%s7 + $0x68] sm:$0xff]
  %v249 = vld [vmem:[%s7 + $0x70] sm:$0xff]
  %v250 = vld [vmem:[%s7 + $0x78] sm:$0xff]
  %251 = vmatpush.msra.mxu0 %v250
  %252 = vmatpush.msra.mxu0 %v249
  %253 = vmatpush.msra.mxu0 %v248
  %254 = vmatpush.msra.mxu0 %v247
  %255 = vmatpush.msra.mxu0 %v246
  %256 = vmatpush.msra.mxu0 %v245
  %257 = vmatpush.msra.mxu0 %v244
  %258 = vmatpush.msra.mxu0 %v243
  %259 = vmatpush.msra.mxu0 %v242
  %260 = vmatpush.msra.mxu0 %v241
  %261 = vmatpush.msra.mxu0 %v240
  %262 = vmatpush.msra.mxu0 %v239
  %263 = vmatpush.msra.mxu0 %v238
  %264 = vmatpush.msra.mxu0 %v237
  %265 = vmatpush.msra.mxu0 %v236
  %266 = vmatpush.msra.mxu0 %v235
  %267 = vmatmul.f32.gmra.mxu0 %v221
  %v268 = vpop.f32.mrf.mxu0
  %v269 = vadd.f32 0.0, %v268
  %270 = vdwg.mxu0
  %271 = vmatpush.msra.mxu0 %v250
  %272 = vmatpush.msra.mxu0 %v249
  %273 = vmatpush.msra.mxu0 %v248
  %274 = vmatpush.msra.mxu0 %v247
  %275 = vmatpush.msra.mxu0 %v246
  %276 = vmatpush.msra.mxu0 %v245
  %277 = vmatpush.msra.mxu0 %v244
  %278 = vmatpush.msra.mxu0 %v243
  %279 = vmatpush.msra.mxu0 %v242
  %280 = vmatpush.msra.mxu0 %v241
  %281 = vmatpush.msra.mxu0 %v240
  %282 = vmatpush.msra.mxu0 %v239
  %283 = vmatpush.msra.mxu0 %v238
  %284 = vmatpush.msra.mxu0 %v237
  %285 = vmatpush.msra.mxu0 %v236
  %286 = vmatpush.msra.mxu0 %v235
  %287 = vmatmul.f32.gmra.mxu0 %v234
  %v288 = vpop.f32.mrf.mxu0
  %v289 = vadd.f32 0.0, %v288
  %290 = vdwg.mxu0
  %v291 = vmul.f32 %v269, 0.001953125
  %v292 = vmul.f32 %v289, 0.001953125
  %v293 = vmul.f32 %v291, %v291
  %v294 = vsub.f32 %v292, %v293
  %v295 = vld [vmem:[%s3] sm:$0x1]
  %v296 = vadd.f32 %v294, 1e-05
  %v297 = vrsqrt.pop %v296
  %v298 = vmul.f32 %v297, %v296
  %v299 = vmul.f32 %v298, %v297
  %v300 = vmul.f32 0.5, %v299
  %v301 = vsub.f32 1.5, %v300
  %v302 = vmul.f32 %v297, %v301
  %vm303 = vweird.f32 %v296
  %vm304 = vweird.f32 %v297
  %vm305 = vmor %vm303, %vm304
  %v306 = vsel %vm305, %v297, %v302
  %v307 = vmul.f32 %v295, %v306
  %v308 = vld [vmem:[%s4] sm:$0x1]
  %v309 = vmul.f32 %v291, %v307
  %v310 = vsub.f32 %v308, %v309
  %v311 = vld [vmem:[%s8] sm:$0xff]
  %vm312 = vcmask 64512
  %v314 = vsel %vm312, %v307, 0
  %316 = vmatpush.msra.mxu0 0.0
  %317 = vmatpush.msra.mxu0 0.0
  %318 = vmatpush.msra.mxu0 0.0
  %319 = vmatpush.msra.mxu0 0.0
  %320 = vmatpush.msra.mxu0 0.0
  %321 = vmatpush.msra.mxu0 0.0
  %322 = vmatpush.msra.mxu0 0.0
  %323 = vmatpush.msra.mxu0 0.0
  %324 = vmatpush.msra.mxu0 0.0
  %325 = vmatpush.msra.mxu0 0.0
  %326 = vmatpush.msra.mxu0 0.0
  %327 = vmatpush.msra.mxu0 0.0
  %328 = vmatpush.msra.mxu0 0.0
  %329 = vmatpush.msra.mxu0 0.0
  %330 = vmatpush.msra.mxu0 0.0
  %331 = vmatpush.msra.mxu0 %v311
  %332 = vmatmul.f32.gmra.mxu0 %v314
  %v333 = vpop.f32.mrf.mxu0
  %v334 = vadd.f32 0.0, %v333
  %335 = vdwg.mxu0
  %v337 = vsel %vm312, %v310, 0
  %339 = vmatpush.msra.mxu0 0.0
  %340 = vmatpush.msra.mxu0 0.0
  %341 = vmatpush.msra.mxu0 0.0
  %342 = vmatpush.msra.mxu0 0.0
  %343 = vmatpush.msra.mxu0 0.0
  %344 = vmatpush.msra.mxu0 0.0
  %345 = vmatpush.msra.mxu0 0.0
  %346 = vmatpush.msra.mxu0 0.0
  %347 = vmatpush.msra.mxu0 0.0
  %348 = vmatpush.msra.mxu0 0.0
  %349 = vmatpush.msra.mxu0 0.0
  %350 = vmatpush.msra.mxu0 0.0
  %351 = vmatpush.msra.mxu0 0.0
  %352 = vmatpush.msra.mxu0 0.0
  %353 = vmatpush.msra.mxu0 0.0
  %354 = vmatpush.msra.mxu0 %v311
  %355 = vmatmul.f32.gmra.mxu0 %v337
  %v356 = vpop.f32.mrf.mxu0
  %v357 = vadd.f32 0.0, %v356
  %358 = vdwg.mxu0
  %v359 = vperm.slane %v334, 0
  %v360 = vmul.f32 %v209, %v359
  %v361 = vmul.f32 %v210, %v359
  %v362 = vmul.f32 %v211, %v359
  %v363 = vmul.f32 %v212, %v359
  %v364 = vperm.slane %v357, 0
  %v365 = vadd.f32 %v360, %v364
  %v366 = vadd.f32 %v361, %v364
  %v367 = vadd.f32 %v362, %v364
  %v368 = vadd.f32 %v363, %v364
  %v369 = vmax.f32 %v365, 0.0
  %v370 = vmax.f32 %v366, 0.0
  %v371 = vmax.f32 %v367, 0.0
  %v372 = vmax.f32 %v368, 0.0
  %373 = vst [vmem:[#allocation3] sm:$0xff] 0.0
  %374 = vst [vmem:[#allocation3 + $0x8] sm:$0xff] 0.0
  %375 = vst [vmem:[#allocation3 + $0x10] sm:$0x3] 0.0
  %376 = vst [vmem:[#allocation3 + $0x18] sm:$0xff] 0.0
  %377 = vst [vmem:[#allocation3 + $0x20] sm:$0xff] 0.0
  %378 = vst [vmem:[#allocation3 + $0x28] sm:$0x3] 0.0
  %379 = vst [vmem:[#allocation3 + $0x1] sm:$0xff] %v369
  %380 = vst [vmem:[#allocation3 + $0x9] sm:$0xff] %v370
  %381 = vst [vmem:[#allocation3 + $0x19] sm:$0xff] %v371
  %382 = vst [vmem:[#allocation3 + $0x21] sm:$0xff] %v372
  %v383 = vld [vmem:[#allocation3] sm:$0xff]
  %v384 = vld [vmem:[#allocation3 + $0x8] sm:$0xff]
  %v385 = vld [vmem:[#allocation3 + $0x18] sm:$0xff]
  %v386 = vld [vmem:[#allocation3 + $0x20] sm:$0xff]
  %v387 = vld [vmem:[%s2] sm:$0xff]
  %v388 = vld [vmem:[%s2 + $0x8] sm:$0xff]
  %v389 = vld [vmem:[%s2 + $0x10] sm:$0xff]
  %v390 = vld [vmem:[%s2 + $0x18] sm:$0xff]
  %v391 = vld [vmem:[%s2 + $0x20] sm:$0xff]
  %v392 = vld [vmem:[%s2 + $0x28] sm:$0xff]
  %v393 = vld [vmem:[%s2 + $0x30] sm:$0xff]
  %v394 = vld [vmem:[%s2 + $0x38] sm:$0xff]
  %v395 = vld [vmem:[%s2 + $0x40] sm:$0xff]
  %v396 = vld [vmem:[%s2 + $0x48] sm:$0xff]
  %v397 = vld [vmem:[%s2 + $0x50] sm:$0xff]
  %v398 = vld [vmem:[%s2 + $0x58] sm:$0xff]
  %v399 = vld [vmem:[%s2 + $0x60] sm:$0xff]
  %v400 = vld [vmem:[%s2 + $0x68] sm:$0xff]
  %v401 = vld [vmem:[%s2 + $0x70] sm:$0xff]
  %v402 = vld [vmem:[%s2 + $0x78] sm:$0xff]
  %v403 = vld [vmem:[#allocation3 + $0x1] sm:$0xff]
  %v404 = vld [vmem:[#allocation3 + $0x9] sm:$0xff]
  %v405 = vld [vmem:[#allocation3 + $0x19] sm:$0xff]
  %v406 = vld [vmem:[#allocation3 + $0x21] sm:$0xff]
  %s407 = scalar_lea.vmem %s2, 128
  %v408 = vld [vmem:[%s407] sm:$0xff]
  %v409 = vld [vmem:[%s407 + $0x8] sm:$0xff]
  %v410 = vld [vmem:[%s407 + $0x10] sm:$0xff]
  %v411 = vld [vmem:[%s407 + $0x18] sm:$0xff]
  %v412 = vld [vmem:[%s407 + $0x20] sm:$0xff]
  %v413 = vld [vmem:[%s407 + $0x28] sm:$0xff]
  %v414 = vld [vmem:[%s407 + $0x30] sm:$0xff]
  %v415 = vld [vmem:[%s407 + $0x38] sm:$0xff]
  %v416 = vld [vmem:[%s407 + $0x40] sm:$0xff]
  %v417 = vld [vmem:[%s407 + $0x48] sm:$0xff]
  %v418 = vld [vmem:[%s407 + $0x50] sm:$0xff]
  %v419 = vld [vmem:[%s407 + $0x58] sm:$0xff]
  %v420 = vld [vmem:[%s407 + $0x60] sm:$0xff]
  %v421 = vld [vmem:[%s407 + $0x68] sm:$0xff]
  %v422 = vld [vmem:[%s407 + $0x70] sm:$0xff]
  %v423 = vld [vmem:[%s407 + $0x78] sm:$0xff]
  %424 = vmatpush.msra.mxu0 %v423
  %425 = vmatpush.msra.mxu0 %v422
  %426 = vmatpush.msra.mxu0 %v421
  %427 = vmatpush.msra.mxu0 %v420
  %428 = vmatpush.msra.mxu0 %v419
  %429 = vmatpush.msra.mxu0 %v418
  %430 = vmatpush.msra.mxu0 %v417
  %431 = vmatpush.msra.mxu0 %v416
  %432 = vmatpush.msra.mxu0 %v415
  %433 = vmatpush.msra.mxu0 %v414
  %434 = vmatpush.msra.mxu0 %v413
  %435 = vmatpush.msra.mxu0 %v412
  %436 = vmatpush.msra.mxu0 %v411
  %437 = vmatpush.msra.mxu0 %v410
  %438 = vmatpush.msra.mxu0 %v409
  %439 = vmatpush.msra.mxu0 %v408
  %440 = vmatmul.f32.gmra.mxu0 %v403
  %v441 = vpop.f32.mrf.mxu0
  %v442 = vadd.f32 0.0, %v441
  %443 = vmatmul.f32.gmra.mxu0 %v404
  %v444 = vpop.f32.mrf.mxu0
  %v445 = vadd.f32 0.0, %v444
  %446 = vmatmul.f32.gmra.mxu0 %v405
  %v447 = vpop.f32.mrf.mxu0
  %v448 = vadd.f32 0.0, %v447
  %449 = vmatmul.f32.gmra.mxu0 %v406
  %v450 = vpop.f32.mrf.mxu0
  %v451 = vadd.f32 0.0, %v450
  %452 = vdwg.mxu0
  %453 = vmatpush.msra.mxu0 %v402
  %454 = vmatpush.msra.mxu0 %v401
  %455 = vmatpush.msra.mxu0 %v400
  %456 = vmatpush.msra.mxu0 %v399
  %457 = vmatpush.msra.mxu0 %v398
  %458 = vmatpush.msra.mxu0 %v397
  %459 = vmatpush.msra.mxu0 %v396
  %460 = vmatpush.msra.mxu0 %v395
  %461 = vmatpush.msra.mxu0 %v394
  %462 = vmatpush.msra.mxu0 %v393
  %463 = vmatpush.msra.mxu0 %v392
  %464 = vmatpush.msra.mxu0 %v391
  %465 = vmatpush.msra.mxu0 %v390
  %466 = vmatpush.msra.mxu0 %v389
  %467 = vmatpush.msra.mxu0 %v388
  %468 = vmatpush.msra.mxu0 %v387
  %469 = vmatmul.f32.gmra.mxu0 %v383
  %v470 = vpop.f32.mrf.mxu0
  %v471 = vadd.f32 %v442, %v470
  %472 = vmatmul.f32.gmra.mxu0 %v384
  %v473 = vpop.f32.mrf.mxu0
  %v474 = vadd.f32 %v445, %v473
  %475 = vmatmul.f32.gmra.mxu0 %v385
  %v476 = vpop.f32.mrf.mxu0
  %v477 = vadd.f32 %v448, %v476
  %478 = vmatmul.f32.gmra.mxu0 %v386
  %v479 = vpop.f32.mrf.mxu0
  %v480 = vadd.f32 %v451, %v479
  %481 = vdwg.mxu0
  %v482 = vld [vmem:[#allocation3 + $0x2] sm:$0xff]
  %v483 = vld [vmem:[#allocation3 + $0xa] sm:$0xff]
  %v484 = vld [vmem:[#allocation3 + $0x1a] sm:$0xff]
  %v485 = vld [vmem:[#allocation3 + $0x22] sm:$0xff]
  %s486 = scalar_lea.vmem %s2, 256
  %v487 = vld [vmem:[%s486] sm:$0xff]
  %v488 = vld [vmem:[%s486 + $0x8] sm:$0xff]
  %v489 = vld [vmem:[%s486 + $0x10] sm:$0xff]
  %v490 = vld [vmem:[%s486 + $0x18] sm:$0xff]
  %v491 = vld [vmem:[%s486 + $0x20] sm:$0xff]
  %v492 = vld [vmem:[%s486 + $0x28] sm:$0xff]
  %v493 = vld [vmem:[%s486 + $0x30] sm:$0xff]
  %v494 = vld [vmem:[%s486 + $0x38] sm:$0xff]
  %v495 = vld [vmem:[%s486 + $0x40] sm:$0xff]
  %v496 = vld [vmem:[%s486 + $0x48] sm:$0xff]
  %v497 = vld [vmem:[%s486 + $0x50] sm:$0xff]
  %v498 = vld [vmem:[%s486 + $0x58] sm:$0xff]
  %v499 = vld [vmem:[%s486 + $0x60] sm:$0xff]
  %v500 = vld [vmem:[%s486 + $0x68] sm:$0xff]
  %v501 = vld [vmem:[%s486 + $0x70] sm:$0xff]
  %v502 = vld [vmem:[%s486 + $0x78] sm:$0xff]
  %503 = vmatpush.msra.mxu0 %v502
  %504 = vmatpush.msra.mxu0 %v501
  %505 = vmatpush.msra.mxu0 %v500
  %506 = vmatpush.msra.mxu0 %v499
  %507 = vmatpush.msra.mxu0 %v498
  %508 = vmatpush.msra.mxu0 %v497
  %509 = vmatpush.msra.mxu0 %v496
  %510 = vmatpush.msra.mxu0 %v495
  %511 = vmatpush.msra.mxu0 %v494
  %512 = vmatpush.msra.mxu0 %v493
  %513 = vmatpush.msra.mxu0 %v492
  %514 = vmatpush.msra.mxu0 %v491
  %515 = vmatpush.msra.mxu0 %v490
  %516 = vmatpush.msra.mxu0 %v489
  %517 = vmatpush.msra.mxu0 %v488
  %518 = vmatpush.msra.mxu0 %v487
  %519 = vmatmul.f32.gmra.mxu0 %v482
  %v520 = vpop.f32.mrf.mxu0
  %v521 = vadd.f32 0.0, %v520
  %522 = vmatmul.f32.gmra.mxu0 %v483
  %v523 = vpop.f32.mrf.mxu0
  %v524 = vadd.f32 0.0, %v523
  %525 = vmatmul.f32.gmra.mxu0 %v484
  %v526 = vpop.f32.mrf.mxu0
  %v527 = vadd.f32 0.0, %v526
  %528 = vmatmul.f32.gmra.mxu0 %v485
  %v529 = vpop.f32.mrf.mxu0
  %v530 = vadd.f32 0.0, %v529
  %531 = vdwg.mxu0
  %v532 = vadd.f32 %v471, %v521
  %v533 = vadd.f32 %v474, %v524
  %v534 = vadd.f32 %v477, %v527
  %v535 = vadd.f32 %v480, %v530
  %v536 = vadd.f32 %v532, %v533
  %v537 = vadd.f32 %v536, %v534
  %v538 = vadd.f32 %v537, %v535
  %v539 = vrot.slane %v538, 4
  %v540 = vadd.f32 %v538, %v539
  %v541 = vrot.slane %v540, 2
  %v542 = vadd.f32 %v540, %v541
  %v543 = vrot.slane %v542, 1
  %v544 = vadd.f32 %v542, %v543
  %v545 = vmul.f32 %v532, %v532
  %v546 = vmul.f32 %v533, %v533
  %v547 = vmul.f32 %v534, %v534
  %v548 = vmul.f32 %v535, %v535
  %v549 = vadd.f32 %v545, %v546
  %v550 = vadd.f32 %v549, %v547
  %v551 = vadd.f32 %v550, %v548
  %v552 = vrot.slane %v551, 4
  %v553 = vadd.f32 %v551, %v552
  %v554 = vrot.slane %v553, 2
  %v555 = vadd.f32 %v553, %v554
  %v556 = vrot.slane %v555, 1
  %v557 = vadd.f32 %v555, %v556
  %v558 = vld [vmem:[%s7] sm:$0xff]
  %v559 = vld [vmem:[%s7 + $0x8] sm:$0xff]
  %v560 = vld [vmem:[%s7 + $0x10] sm:$0xff]
  %v561 = vld [vmem:[%s7 + $0x18] sm:$0xff]
  %v562 = vld [vmem:[%s7 + $0x20] sm:$0xff]
  %v563 = vld [vmem:[%s7 + $0x28] sm:$0xff]
  %v564 = vld [vmem:[%s7 + $0x30] sm:$0xff]
  %v565 = vld [vmem:[%s7 + $0x38] sm:$0xff]
  %v566 = vld [vmem:[%s7 + $0x40] sm:$0xff]
  %v567 = vld [vmem:[%s7 + $0x48] sm:$0xff]
  %v568 = vld [vmem:[%s7 + $0x50] sm:$0xff]
  %v569 = vld [vmem:[%s7 + $0x58] sm:$0xff]
  %v570 = vld [vmem:[%s7 + $0x60] sm:$0xff]
  %v571 = vld [vmem:[%s7 + $0x68] sm:$0xff]
  %v572 = vld [vmem:[%s7 + $0x70] sm:$0xff]
  %v573 = vld [vmem:[%s7 + $0x78] sm:$0xff]
  %574 = vmatpush.msra.mxu0 %v573
  %575 = vmatpush.msra.mxu0 %v572
  %576 = vmatpush.msra.mxu0 %v571
  %577 = vmatpush.msra.mxu0 %v570
  %578 = vmatpush.msra.mxu0 %v569
  %579 = vmatpush.msra.mxu0 %v568
  %580 = vmatpush.msra.mxu0 %v567
  %581 = vmatpush.msra.mxu0 %v566
  %582 = vmatpush.msra.mxu0 %v565
  %583 = vmatpush.msra.mxu0 %v564
  %584 = vmatpush.msra.mxu0 %v563
  %585 = vmatpush.msra.mxu0 %v562
  %586 = vmatpush.msra.mxu0 %v561
  %587 = vmatpush.msra.mxu0 %v560
  %588 = vmatpush.msra.mxu0 %v559
  %589 = vmatpush.msra.mxu0 %v558
  %590 = vmatmul.f32.gmra.mxu0 %v544
  %v591 = vpop.f32.mrf.mxu0
  %v592 = vadd.f32 0.0, %v591
  %593 = vdwg.mxu0
  %594 = vmatpush.msra.mxu0 %v573
  %595 = vmatpush.msra.mxu0 %v572
  %596 = vmatpush.msra.mxu0 %v571
  %597 = vmatpush.msra.mxu0 %v570
  %598 = vmatpush.msra.mxu0 %v569
  %599 = vmatpush.msra.mxu0 %v568
  %600 = vmatpush.msra.mxu0 %v567
  %601 = vmatpush.msra.mxu0 %v566
  %602 = vmatpush.msra.mxu0 %v565
  %603 = vmatpush.msra.mxu0 %v564
  %604 = vmatpush.msra.mxu0 %v563
  %605 = vmatpush.msra.mxu0 %v562
  %606 = vmatpush.msra.mxu0 %v561
  %607 = vmatpush.msra.mxu0 %v560
  %608 = vmatpush.msra.mxu0 %v559
  %609 = vmatpush.msra.mxu0 %v558
  %610 = vmatmul.f32.gmra.mxu0 %v557
  %v611 = vpop.f32.mrf.mxu0
  %v612 = vadd.f32 0.0, %v611
  %613 = vdwg.mxu0
  %v614 = vmul.f32 %v592, 0.001953125
  %v615 = vmul.f32 %v612, 0.001953125
  %v616 = vmul.f32 %v614, %v614
  %v617 = vsub.f32 %v615, %v616
  %v618 = vld [vmem:[%s5] sm:$0x1]
  %v619 = vadd.f32 %v617, 1e-05
  %v620 = vrsqrt.pop %v619
  %v621 = vmul.f32 %v620, %v619
  %v622 = vmul.f32 %v621, %v620
  %v623 = vmul.f32 0.5, %v622
  %v624 = vsub.f32 1.5, %v623
  %v625 = vmul.f32 %v620, %v624
  %vm626 = vweird.f32 %v619
  %vm627 = vweird.f32 %v620
  %vm628 = vmor %vm626, %vm627
  %v629 = vsel %vm628, %v620, %v625
  %v630 = vmul.f32 %v618, %v629
  %v631 = vld [vmem:[%s6] sm:$0x1]
  %v632 = vmul.f32 %v614, %v630
  %v633 = vsub.f32 %v631, %v632
  %v634 = vld [vmem:[%s8] sm:$0xff]
  %v636 = vsel %vm312, %v630, 0
  %638 = vmatpush.msra.mxu0 0.0
  %639 = vmatpush.msra.mxu0 0.0
  %640 = vmatpush.msra.mxu0 0.0
  %641 = vmatpush.msra.mxu0 0.0
  %642 = vmatpush.msra.mxu0 0.0
  %643 = vmatpush.msra.mxu0 0.0
  %644 = vmatpush.msra.mxu0 0.0
  %645 = vmatpush.msra.mxu0 0.0
  %646 = vmatpush.msra.mxu0 0.0
  %647 = vmatpush.msra.mxu0 0.0
  %648 = vmatpush.msra.mxu0 0.0
  %649 = vmatpush.msra.mxu0 0.0
  %650 = vmatpush.msra.mxu0 0.0
  %651 = vmatpush.msra.mxu0 0.0
  %652 = vmatpush.msra.mxu0 0.0
  %653 = vmatpush.msra.mxu0 %v634
  %654 = vmatmul.f32.gmra.mxu0 %v636
  %v655 = vpop.f32.mrf.mxu0
  %v656 = vadd.f32 0.0, %v655
  %657 = vdwg.mxu0
  %v659 = vsel %vm312, %v633, 0
  %661 = vmatpush.msra.mxu0 0.0
  %662 = vmatpush.msra.mxu0 0.0
  %663 = vmatpush.msra.mxu0 0.0
  %664 = vmatpush.msra.mxu0 0.0
  %665 = vmatpush.msra.mxu0 0.0
  %666 = vmatpush.msra.mxu0 0.0
  %667 = vmatpush.msra.mxu0 0.0
  %668 = vmatpush.msra.mxu0 0.0
  %669 = vmatpush.msra.mxu0 0.0
  %670 = vmatpush.msra.mxu0 0.0
  %671 = vmatpush.msra.mxu0 0.0
  %672 = vmatpush.msra.mxu0 0.0
  %673 = vmatpush.msra.mxu0 0.0
  %674 = vmatpush.msra.mxu0 0.0
  %675 = vmatpush.msra.mxu0 0.0
  %676 = vmatpush.msra.mxu0 %v634
  %677 = vmatmul.f32.gmra.mxu0 %v659
  %v678 = vpop.f32.mrf.mxu0
  %v679 = vadd.f32 0.0, %v678
  %680 = vdwg.mxu0
  %v681 = vperm.slane %v656, 0
  %v682 = vmul.f32 %v532, %v681
  %v683 = vmul.f32 %v533, %v681
  %v684 = vmul.f32 %v534, %v681
  %v685 = vmul.f32 %v535, %v681
  %v686 = vperm.slane %v679, 0
  %v687 = vadd.f32 %v682, %v686
  %v688 = vadd.f32 %v683, %v686
  %v689 = vadd.f32 %v684, %v686
  %v690 = vadd.f32 %v685, %v686
  %v691 = vmax.f32 %v687, 0.0
  %v692 = vmax.f32 %v688, 0.0
  %v693 = vmax.f32 %v689, 0.0
  %v694 = vmax.f32 %v690, 0.0
  %695 = vst [vmem:[%s9] sm:$0xff] %v691
  %696 = vst [vmem:[%s9 + $0x8] sm:$0xff] %v692
  %697 = vst [vmem:[%s9 + $0x10] sm:$0xff] %v693
  %698 = vst [vmem:[%s9 + $0x18] sm:$0xff] %v694
  // Predicated region
  $region38: #{conv_block_3_forward.1} parent=0 // pred_check
    _
  $region39: #{conv_block_3_forward.1} parent=0 // pred_check_branch
    %700 = sbr.rel (0) target = $region41
  $region40: #{conv_block_3_forward.1} parent=0 // pred_region
    _
  $region41: #{conv_block_3_forward.1} parent=0 // pred_fallthru
    _
  // Predicated region
  $region42: #{conv_block_3_forward.1} parent=0 // pred_check
    _
  $region43: #{conv_block_3_forward.1} parent=0 // pred_check_branch
    %702 = sbr.rel (0) target = $region45
  $region44: #{conv_block_3_forward.1} parent=0 // pred_region
    _
  $region45: #{conv_block_3_forward.1} parent=0 // pred_fallthru
    _

</llo_original>
